<compile_context>
chip_gen: v6e
topology: v6e:2x2x1
jax: 0.10.0
libtpu: 0.0.40
codegen_flags: <defaults>
</compile_context>

<pallas_src>
import functools

import jax
import jax.numpy as jnp
from jax.experimental import pallas as pl
from jax.experimental.pallas import tpu as pltpu


# --------------------------------------------------------------------------------------
# Pallas kernel: tiled MLP hidden layer + segment (graph) sum-reduction + final projection
# --------------------------------------------------------------------------------------
def _graph_head_kernel(batch_ref, x_ref, w1_ref, b1_ref, w2_ref,
                       out_ref, acc_ref, *, compute_dtype):
    # batch_ref : [1, T]        int32  molecule id per atom (lane-dense)
    # x_ref     : [T, E]        native dtype of the backbone activations
    # w1_ref    : [E, E]        compute dtype (bf16 fast path / f32 exact path)
    # b1_ref    : [1, E]        f32
    # w2_ref    : [E, C]        f32 (final projection stays full precision)
    # out_ref   : [n_mol, C]    f32 partial output for this core split (squeezed lead dim)
    # acc_ref   : [n_mol, E]    f32 scratch: segment-summed hidden activations
    step = pl.program_id(1)
    n_mol = acc_ref.shape[0]
    tile = x_ref.shape[0]

    @pl.when(step == 0)
    def _init():
        acc_ref[...] = jnp.zeros_like(acc_ref)

    # Cast inside the kernel (VPU; hides under MXU/DMA) -> x is DMA'd in its native dtype.
    x_t = x_ref[...].astype(compute_dtype)

    # ---- out_mlp layer 1: Linear + SiLU (f32 activation math; sigmoid on the EUP)
    h = jnp.dot(x_t, w1_ref[...], preferred_element_type=jnp.float32)
    h = h + b1_ref[...]
    h = h * jax.nn.sigmoid(h)

    # ---- segment-sum over atoms via lane-dense one-hot matmul on the MXU.
    #      iota regenerated per grid step (cheap VPU work, no n_mol*T VMEM scratch).
    iota = jax.lax.broadcasted_iota(jnp.int32, (n_mol, tile), 0)
    onehot = (iota == batch_ref[...]).astype(compute_dtype)          # exact 0/1
    acc_ref[...] += jnp.dot(onehot, h.astype(compute_dtype),
                            preferred_element_type=jnp.float32)

    # ---- final Linear applied ONCE per core split on the reduced [n_mol, E] (f32 x f32).
    @pl.when(step == pl.num_programs(1) - 1)
    def _finalize():
        out_ref[...] = jnp.dot(acc_ref[...], w2_ref[...],
                               preferred_element_type=jnp.float32)


def graph_multiclass_head(x, batch, params, n_molecules, *,
                          atom_tile=2048, compute_dtype=jnp.bfloat16,
                          core_splits=1, vmem_limit_bytes=None):
    """x: [n_atoms, E] backbone activations (native dtype), batch: [n_atoms] int32 molecule
    ids, params: {"w1","b1","w2","b2"}.  Set core_splits=2 on v7x (2 TensorCores/chip);
    cap atom_tile ~2048 on v5e or pass vmem_limit_bytes when going larger."""
    n_atoms, emb = x.shape
    num_classes = params["w2"].shape[1]

    # Atom tile: lane-aligned (multiple of 128), shrunk for small inputs to avoid padding waste.
    per_split = pl.cdiv(n_atoms, core_splits)
    atom_tile = max(128, min((atom_tile // 128) * 128, pl.cdiv(per_split, 128) * 128))
    chunk = core_splits * atom_tile
    n_pad = pl.cdiv(n_atoms, chunk) * chunk
    steps_per_split = n_pad // chunk

    batch_i32 = batch.astype(jnp.int32)
    if n_pad != n_atoms:
        x_p = jnp.pad(x, ((0, n_pad - n_atoms), (0, 0)))
        # Out-of-range id -> dropped by the one-hot (matches segment_sum semantics).
        batch_p = jnp.pad(batch_i32, (0, n_pad - n_atoms), constant_values=n_molecules)
    else:
        x_p, batch_p = x, batch_i32
    batch2d = batch_p.reshape(1, n_pad)

    w1 = params["w1"].astype(compute_dtype)
    b1 = params["b1"].astype(jnp.float32).reshape(1, emb)
    w2 = params["w2"].astype(jnp.float32)
    b2 = params["b2"].astype(jnp.float32).reshape(1, num_classes)

    x_itemsize = jnp.dtype(x.dtype).itemsize
    c_itemsize = jnp.dtype(compute_dtype).itemsize
    cost = pl.CostEstimate(
        flops=(2 * n_pad * emb * emb                                  # layer-1 matmul
               + 2 * n_pad * n_molecules * emb                        # one-hot seg-sum matmul
               + 2 * core_splits * n_molecules * emb * num_classes),  # final (tiny) matmul
        transcendentals=n_pad * emb,                                  # sigmoid
        bytes_accessed=(n_pad * emb * x_itemsize + n_pad * 4
                        + emb * emb * c_itemsize + emb * 4 + emb * num_classes * 4
                        + core_splits * n_molecules * num_classes * 4),
    )

    kernel = functools.partial(_graph_head_kernel, compute_dtype=compute_dtype)

    grid_spec = pltpu.PrefetchScalarGridSpec(
        num_scalar_prefetch=0,
        grid=(core_splits, steps_per_split),
        in_specs=[
            pl.BlockSpec((1, atom_tile),                              # batch ids (lane-dense)
                         lambda c, i: (0, c * steps_per_split + i)),
            pl.BlockSpec((atom_tile, emb),                            # x tile, native dtype
                         lambda c, i: (c * steps_per_split + i, 0)),
            pl.BlockSpec((emb, emb), lambda c, i: (0, 0)),            # w1 (resident)
            pl.BlockSpec((1, emb), lambda c, i: (0, 0)),              # b1
            pl.BlockSpec((emb, num_classes), lambda c, i: (0, 0)),    # w2 (f32, resident)
        ],
        out_specs=pl.BlockSpec((pl.Squeezed(), n_molecules, num_classes),
                               lambda c, i: (c, 0, 0)),
        scratch_shapes=[
            pltpu.VMEM((n_molecules, emb), jnp.float32),              # seg-sum accumulator
        ],
    )

    parts = pl.pallas_call(
        kernel,
        out_shape=jax.ShapeDtypeStruct((core_splits, n_molecules, num_classes), jnp.float32),
        grid_spec=grid_spec,
        compiler_params=pltpu.CompilerParams(
            dimension_semantics=("parallel", "arbitrary"),   # core split || atom reduction
            vmem_limit_bytes=vmem_limit_bytes,
        ),
        cost_estimate=cost,
    )(batch2d, x_p, w1, b1, w2)

    # Bias via per-molecule atom counts (function of `batch` only; tiny one-off XLA op):
    #   segment_sum(h @ w2 + b2) == segment_sum(h) @ w2 + counts * b2
    counts = jax.ops.segment_sum(jnp.ones((n_atoms,), jnp.float32), batch_i32,
                                 num_segments=n_molecules)
    return parts.sum(axis=0) + counts[:, None] * b2


# --------------------------------------------------------------------------------------
# Pure-JAX reference (for sanity checking the kernel)
# --------------------------------------------------------------------------------------
def _reference(x, batch, params, n_molecules):
    h = x @ params["w1"] + params["b1"]
    h = h * jax.nn.sigmoid(h)
    y = h @ params["w2"] + params["b2"]
    return jax.ops.segment_sum(y, batch, num_segments=n_molecules)


if __name__ == "__main__":
    # Small shapes consistent with the module:
    #   emb_size_atom = 128, num_mlps = 2 -> dims [128, 128, num_classes]
    #   num_classes = 8, n_atoms = 200 (uneven -> exercises padding), n_molecules = 4
    N_ATOMS, EMB, NUM_CLASSES, N_MOL = 200, 128, 8, 4
    ATOM_TILE = 128   # small tile so the demo exercises the multi-step accumulator path

    key = jax.random.PRNGKey(0)
    k_x, k_b, k_w1, k_b1, k_w2, k_b2 = jax.random.split(key, 6)

    x = jax.random.normal(k_x, (N_ATOMS, EMB), dtype=jnp.float32)
    batch = jax.random.randint(k_b, (N_ATOMS,), 0, N_MOL, dtype=jnp.int32)

    params = {
        "w1": jax.random.normal(k_w1, (EMB, EMB), dtype=jnp.float32) * (1.0 / EMB**0.5),
        "b1": jax.random.normal(k_b1, (EMB,), dtype=jnp.float32) * 0.01,
        "w2": jax.random.normal(k_w2, (EMB, NUM_CLASSES), dtype=jnp.float32) * (1.0 / EMB**0.5),
        "b2": jax.random.normal(k_b2, (NUM_CLASSES,), dtype=jnp.float32) * 0.01,
    }

    ref = _reference(x, batch, params, N_MOL)

    # Exact path (f32 operands), single core split, multi-step reduction — tight check.
    out_f32 = jax.block_until_ready(
        graph_multiclass_head(x, batch, params, N_MOL,
                              atom_tile=ATOM_TILE, compute_dtype=jnp.float32,
                              core_splits=1))
    assert out_f32.shape == (N_MOL, NUM_CLASSES)
    assert jnp.allclose(out_f32, ref, atol=1e-3, rtol=1e-3), \
        f"f32 max err {float(jnp.max(jnp.abs(out_f32 - ref)))}"

    # Fast path (bf16 MXU operands, f32 accumulation, in-kernel cast) — looser check.
    out_bf16 = jax.block_until_ready(
        graph_multiclass_head(x, batch, params, N_MOL,
                              atom_tile=ATOM_TILE, compute_dtype=jnp.bfloat16,
                              core_splits=1))
    assert out_bf16.shape == (N_MOL, NUM_CLASSES)
    assert jnp.allclose(out_bf16, ref, atol=5e-2, rtol=5e-2), \
        f"bf16 max err {float(jnp.max(jnp.abs(out_bf16 - ref)))}"

    # v7x-style core-split path (2-way parallel atom split, partials summed in XLA).
    out_split = jax.block_until_ready(
        graph_multiclass_head(x, batch, params, N_MOL,
                              atom_tile=ATOM_TILE, compute_dtype=jnp.bfloat16,
                              core_splits=2))
    assert out_split.shape == (N_MOL, NUM_CLASSES)
    assert jnp.allclose(out_split, ref, atol=5e-2, rtol=5e-2), \
        f"core-split max err {float(jnp.max(jnp.abs(out_split - ref)))}"

    # Default (large) atom_tile path — auto-shrinks to the input size.
    out_default = jax.block_until_ready(
        graph_multiclass_head(x, batch, params, N_MOL, compute_dtype=jnp.bfloat16))
    assert jnp.allclose(out_default, ref, atol=5e-2, rtol=5e-2), \
        f"default-tile max err {float(jnp.max(jnp.abs(out_default - ref)))}"

    print("KERNEL_OK")
</pallas_src>

<mosaic_0001>
module attributes {stable_mosaic.version = 11 : i64} {
  func.func @_graph_head_kernel(%arg0: i32, %arg1: i32, %arg2: memref<1x128xi32, #tpu.memory_space<vmem>>, %arg3: memref<128x128xf32, #tpu.memory_space<vmem>>, %arg4: memref<128x128xf32, #tpu.memory_space<vmem>>, %arg5: memref<1x128xf32, #tpu.memory_space<vmem>>, %arg6: memref<128x8xf32, #tpu.memory_space<vmem>>, %arg7: memref<1x4x8xf32, #tpu.memory_space<vmem>>, %arg8: memref<4x128xf32, #tpu.memory_space<vmem>>) attributes {dimension_semantics = [#tpu.dimension_semantics<parallel>, #tpu.dimension_semantics<arbitrary>], iteration_bounds = array<i64: 1, 2>, scalar_prefetch = 0 : i64, scratch_operands = 1 : i64, tpu.core_type = #tpu.core_type<tc>, window_params = [{transform_indices = @transform_0, window_bounds = array<i64: 1, 128>}, {transform_indices = @transform_1, window_bounds = array<i64: 128, 128>}, {pipeline_mode = #tpu.pipeline_mode<synchronous>, transform_indices = @transform_2, window_bounds = array<i64: 128, 128>}, {pipeline_mode = #tpu.pipeline_mode<synchronous>, transform_indices = @transform_3, window_bounds = array<i64: 1, 128>}, {pipeline_mode = #tpu.pipeline_mode<synchronous>, transform_indices = @transform_4, window_bounds = array<i64: 128, 8>}, {transform_indices = @transform_5, window_bounds = array<i64: 1, 4, 8>}]} {
    %c0_i32 = arith.constant 0 : i32
    %0 = arith.cmpi eq, %arg1, %c0_i32 : i32
    %1 = arith.extui %0 : i1 to i32
    %c0_i32_0 = arith.constant 0 : i32
    %2 = arith.cmpi ne, %1, %c0_i32_0 : i32
    scf.if %2 {
      %cst_15 = arith.constant 0.000000e+00 : f32
      %28 = vector.broadcast %cst_15 : f32 to vector<4x128xf32>
      %c0_16 = arith.constant 0 : index
      %c0_17 = arith.constant 0 : index
      %29 = vector.load %arg8[%c0_16, %c0_17] : memref<4x128xf32, #tpu.memory_space<vmem>>, vector<4x128xf32>
      tpu.vector_store %arg8[%c0_16, %c0_17], %28 {strides = array<i32>} : memref<4x128xf32, #tpu.memory_space<vmem>>, vector<4x128xf32>,
    } else {
    }
    %c0 = arith.constant 0 : index
    %c0_1 = arith.constant 0 : index
    %3 = vector.load %arg3[%c0, %c0_1] : memref<128x128xf32, #tpu.memory_space<vmem>>, vector<128x128xf32>
    %c0_2 = arith.constant 0 : index
    %c0_3 = arith.constant 0 : index
    %4 = vector.load %arg4[%c0_2, %c0_3] : memref<128x128xf32, #tpu.memory_space<vmem>>, vector<128x128xf32>
    %cst = arith.constant dense<0.000000e+00> : vector<128x128xf32>
    %5 = tpu.matmul %3, %4, %cst {dimension_numbers = #tpu.dot_dimension_numbers<[1], [0], [0], [1], [0, 0, 1, 1], [], []>} : vector<128x128xf32>, vector<128x128xf32>, vector<128x128xf32> -> vector<128x128xf32>
    %c0_4 = arith.constant 0 : index
    %c0_5 = arith.constant 0 : index
    %6 = vector.load %arg5[%c0_4, %c0_5] : memref<1x128xf32, #tpu.memory_space<vmem>>, vector<1x128xf32>
    %7 = vector.broadcast %6 : vector<1x128xf32> to vector<128x128xf32>
    %8 = arith.addf %5, %7 : vector<128x128xf32>
    %9 = arith.negf %8 : vector<128x128xf32>
    %10 = math.exp %9 : vector<128x128xf32>
    %cst_6 = arith.constant 1.000000e+00 : f32
    %11 = vector.broadcast %cst_6 : f32 to vector<128x128xf32>
    %12 = arith.addf %11, %10 : vector<128x128xf32>
    %13 = arith.divf %11, %12 : vector<128x128xf32>
    %14 = arith.mulf %8, %13 : vector<128x128xf32>
    %15 = tpu.iota {dimensions = array<i32: 0>} : vector<4x128xi32>
    %c0_7 = arith.constant 0 : index
    %c0_8 = arith.constant 0 : index
    %16 = vector.load %arg2[%c0_7, %c0_8] : memref<1x128xi32, #tpu.memory_space<vmem>>, vector<1x128xi32>
    %17 = vector.broadcast %16 : vector<1x128xi32> to vector<4x128xi32>
    %18 = arith.cmpi eq, %15, %17 : vector<4x128xi32>
    %19 = arith.extui %18 : vector<4x128xi1> to vector<4x128xi32>
    %20 = arith.sitofp %19 : vector<4x128xi32> to vector<4x128xf32>
    %c0_9 = arith.constant 0 : index
    %c0_10 = arith.constant 0 : index
    %21 = vector.load %arg8[%c0_9, %c0_10] : memref<4x128xf32, #tpu.memory_space<vmem>>, vector<4x128xf32>
    %cst_11 = arith.constant dense<0.000000e+00> : vector<4x128xf32>
    %22 = tpu.matmul %20, %14, %cst_11 {dimension_numbers = #tpu.dot_dimension_numbers<[1], [0], [0], [1], [0, 0, 1, 1], [], []>} : vector<4x128xf32>, vector<128x128xf32>, vector<4x128xf32> -> vector<4x128xf32>
    %23 = arith.addf %21, %22 : vector<4x128xf32>
    %c0_12 = arith.constant 0 : index
    %c0_13 = arith.constant 0 : index
    %24 = vector.load %arg8[%c0_12, %c0_13] : memref<4x128xf32, #tpu.memory_space<vmem>>, vector<4x128xf32>
    tpu.vector_store %arg8[%c0_12, %c0_13], %23 {strides = array<i32>} : memref<4x128xf32, #tpu.memory_space<vmem>>, vector<4x128xf32>,
    %c1_i32 = arith.constant 1 : i32
    %25 = arith.cmpi eq, %arg1, %c1_i32 : i32
    %26 = arith.extui %25 : i1 to i32
    %c0_i32_14 = arith.constant 0 : i32
    %27 = arith.cmpi ne, %26, %c0_i32_14 : i32
    scf.if %27 {
      %c0_15 = arith.constant 0 : index
      %c0_16 = arith.constant 0 : index
      %28 = vector.load %arg8[%c0_15, %c0_16] : memref<4x128xf32, #tpu.memory_space<vmem>>, vector<4x128xf32>
      %c0_17 = arith.constant 0 : index
      %c0_18 = arith.constant 0 : index
      %29 = vector.load %arg6[%c0_17, %c0_18] : memref<128x8xf32, #tpu.memory_space<vmem>>, vector<128x8xf32>
      %cst_19 = arith.constant dense<0.000000e+00> : vector<4x8xf32>
      %30 = tpu.matmul %28, %29, %cst_19 {dimension_numbers = #tpu.dot_dimension_numbers<[1], [0], [0], [1], [0, 0, 1, 1], [], []>} : vector<4x128xf32>, vector<128x8xf32>, vector<4x8xf32> -> vector<4x8xf32>
      %c0_20 = arith.constant 0 : index
      %c0_21 = arith.constant 0 : index
      %c0_22 = arith.constant 0 : index
      %31 = vector.load %arg7[%c0_20, %c0_21, %c0_22] : memref<1x4x8xf32, #tpu.memory_space<vmem>>, vector<1x4x8xf32>
      %32 = vector.shape_cast %31 : vector<1x4x8xf32> to vector<4x8xf32>
      %33 = vector.shape_cast %30 : vector<4x8xf32> to vector<1x4x8xf32>
      tpu.vector_store %arg7[%c0_20, %c0_21, %c0_22], %33 {strides = array<i32>} : memref<1x4x8xf32, #tpu.memory_space<vmem>>, vector<1x4x8xf32>,
    } else {
    }
    return
  }
  func.func @transform_0(%arg0: i32, %arg1: i32) -> (i32, i32) {
    %c2_i32 = arith.constant 2 : i32
    %0 = arith.muli %arg0, %c2_i32 : i32
    %1 = arith.addi %0, %arg1 : i32
    %c0_i32 = arith.constant 0 : i32
    %c0_i32_0 = arith.constant 0 : i32
    return %c0_i32, %1 : i32, i32
  }
  func.func @transform_1(%arg0: i32, %arg1: i32) -> (i32, i32) {
    %c2_i32 = arith.constant 2 : i32
    %0 = arith.muli %arg0, %c2_i32 : i32
    %1 = arith.addi %0, %arg1 : i32
    %c0_i32 = arith.constant 0 : i32
    %c0_i32_0 = arith.constant 0 : i32
    return %1, %c0_i32 : i32, i32
  }
  func.func @transform_2(%arg0: i32, %arg1: i32) -> (i32, i32) {
    %c0_i32 = arith.constant 0 : i32
    %c0_i32_0 = arith.constant 0 : i32
    %c0_i32_1 = arith.constant 0 : i32
    return %c0_i32, %c0_i32_0 : i32, i32
  }
  func.func @transform_3(%arg0: i32, %arg1: i32) -> (i32, i32) {
    %c0_i32 = arith.constant 0 : i32
    %c0_i32_0 = arith.constant 0 : i32
    %c0_i32_1 = arith.constant 0 : i32
    return %c0_i32, %c0_i32_0 : i32, i32
  }
  func.func @transform_4(%arg0: i32, %arg1: i32) -> (i32, i32) {
    %c0_i32 = arith.constant 0 : i32
    %c0_i32_0 = arith.constant 0 : i32
    %c0_i32_1 = arith.constant 0 : i32
    return %c0_i32, %c0_i32_0 : i32, i32
  }
  func.func @transform_5(%arg0: i32, %arg1: i32) -> (i32, i32, i32) {
    %c0_i32 = arith.constant 0 : i32
    %c0_i32_0 = arith.constant 0 : i32
    %c0_i32_1 = arith.constant 0 : i32
    return %arg0, %c0_i32, %c0_i32_0 : i32, i32, i32
  }
}

</mosaic_0001>

<llo_original>
// kernel: tpu_custom_call.1
$region0: #{tpu_custom_call.1}
  #allocation0 [shape = 'u32[]', space=smem, size = 0x4, offset = 0x4, fixed_abs, tag = 'smem constant byte address 0x4 - core index']
  #allocation1 [shape = 'u32[144,128]{1,0:T(1,128)}', space=vmem, size = 0x12000, scoped, tag = 'internal scratch']
  #allocation2 [shape = 'f32[4,128]{1,0:T(4,128)}', space=vmem, size = 0x800, scoped, tag = 'scratch operand']
  %s0 = inlined_call_operand.vmem [shape: s32[1,256], index: 0, kind: input, shape index: {}]
  %s1 = inlined_call_operand.hbm [shape: f32[256,128], index: 1, kind: input, shape index: {}]
  %s2 = inlined_call_operand.vmem [shape: f32[128,128], index: 2, kind: input, shape index: {}]
  %s3 = inlined_call_operand.vmem [shape: f32[1,128], index: 3, kind: input, shape index: {}]
  %s4 = inlined_call_operand.vmem [shape: f32[128,8], index: 4, kind: input, shape index: {}]
  %s5 = inlined_call_operand.hbm [shape: f32[1,4,8], index: 5, kind: output, shape index: {}]
  %s6 = sld [smem:[#allocation0]]
  $region65: #{tpu_custom_call.1} parent=0
    _
  %s8 = ssub.s32 1, %s6
  %s9 = scalar_select 0, %s8, %s6
  $region1: #{tpu_custom_call.1} parent=0
    #allocation3 [shape = 'u8[131072]{0}', space=vmem, size = 0x20000, scoped, tag = 'input window, operand 1']
    #allocation4 [shape = 's32[2]{0}', space=sflag, size = 0x8, scoped, tag = 'scoped memory for tpu_custom_call.1']
    #allocation5 [shape = 's32[2]{0}', space=sflag, size = 0x8, scoped, tag = 'scoped memory for tpu_custom_call.1']
    #allocation6 [shape = 'u8[2048]{0}', space=vmem, size = 0x800, scoped, tag = 'output window, operand 0, single buffered']
    %10 = vsyncpa [#allocation4], 0
    %s11 = scalar_lea.sflag [#allocation4], 1
    %12 = vsyncpa %s11, 0
    %13 = vsyncpa [#allocation5], 0
    loop: start=0, step=1, limit=4
    $region2: #{tpu_custom_call.1} parent=1 // loop_pre_header
      _
    $region3: #{tpu_custom_call.1} parent=1 // loop_header
      %s15 = sphi 0, %s19
      %p16 = scmp.ge.s32.totalorder %s15, 4
      %s22 = sphi 0, %s34
      %s23 = sphi 0, %s30
      %s24 = sphi 0, %s22
      %s25 = sphi 0, %s23
      %s26 = sphi 0, %s24
      %s27 = sphi 0, %s25
      %s41 = sphi 0, %s43
      %s44 = sphi 0, %s41
      %s45 = sphi 0, %s44
      %s61 = sphi 0, %s45
      %s71 = sphi 0, %s73
      %s74 = sphi 0, %s71
      %s75 = sphi 0, %s74
      %s91 = sphi 0, %s75
      %s95 = sphi 0, %s95
      %s97 = sphi 0, %s95
      %s98 = sphi 0, %s97
      %s112 = sphi 0, %s98
      %s116 = sphi 0, %s116
      %s118 = sphi 0, %s116
      %s119 = sphi 0, %s118
      %s133 = sphi 0, %s119
      %s137 = sphi 0, %s137
      %s139 = sphi 0, %s137
      %s140 = sphi 0, %s139
      %s154 = sphi 0, %s140
      %s160 = sphi 0, %s162
      %s163 = sphi 0, %s160
      %s164 = sphi 0, %s163
      %s180 = sphi 0, %s164
    $region4: #{tpu_custom_call.1} parent=1 // loop_header_branch
      %18 = sbr.rel (%p16) target = $region8
    $region5: #{tpu_custom_call.1} parent=1 // loop_body
      %s20 = ssub.s32 %s15, 1
      %s21 = ssub.s32 %s15, 2
      %s28 = sadd.s32 1, %s23
      %p29 = scmp.ge.s32.totalorder %s28, 2
      %s30 = scalar_select %p29, 0, %s28
      %s31 = sadd.s32 1, %s22
      %s32 = scalar_select %p29, %s31, %s22
      %p33 = scmp.ge.s32.totalorder %s32, 1
      %s34 = scalar_select %p33, 0, %s32
      %s35 = smul.u32 %s22, 2
      %s36 = sadd.s32 %s35, %s23
      %s37 = smul.u32 %s34, 2
      %s38 = sadd.s32 %s37, %s30
      %s39 = ssub.s32 %s36, %s38
      %p40 = scmp.eq.s32.totalorder %s39, 0
      %s42 = sadd.s32 %s41, 1
      %s43 = scalar_select %p40, %s41, %s42
      %p46 = pneg %p40
      %p47 = scmp.eq.s32.totalorder %s15, 1
      %p48 = por %p46, %p47
      %p49 = scmp.ne.s32.totalorder %s41, %s44
      %p50 = scmp.eq.s32.totalorder %s15, 0
      %p51 = por %p49, %p50
      %p52 = scmp.ne.s32.totalorder %s41, %s44
      %p53 = scmp.eq.s32.totalorder %s20, 1
      %p54 = por %p52, %p53
      %p55 = scmp.ne.s32.totalorder %s44, %s45
      %p56 = scmp.eq.s32.totalorder %s20, 0
      %p57 = por %p55, %p56
      %p58 = scmp.ne.s32.totalorder %s44, %s45
      %p59 = scmp.eq.s32.totalorder %s21, 1
      %p60 = por %p58, %p59
      %p62 = scmp.ne.s32.totalorder %s45, %s61
      %p63 = scmp.eq.s32.totalorder %s21, 0
      %p64 = por %p62, %p63
      %s65 = smul.u32 %s22, 2
      %s66 = sadd.s32 %s65, %s23
      %s67 = smul.u32 %s34, 2
      %s68 = sadd.s32 %s67, %s30
      %s69 = ssub.s32 %s66, %s68
      %p70 = scmp.eq.s32.totalorder %s69, 0
      %s72 = sadd.s32 %s71, 1
      %s73 = scalar_select %p70, %s71, %s72
      %p76 = pneg %p70
      %p77 = scmp.eq.s32.totalorder %s15, 1
      %p78 = por %p76, %p77
      %p79 = scmp.ne.s32.totalorder %s71, %s74
      %p80 = scmp.eq.s32.totalorder %s15, 0
      %p81 = por %p79, %p80
      %p82 = scmp.ne.s32.totalorder %s71, %s74
      %p83 = scmp.eq.s32.totalorder %s20, 1
      %p84 = por %p82, %p83
      %p85 = scmp.ne.s32.totalorder %s74, %s75
      %p86 = scmp.eq.s32.totalorder %s20, 0
      %p87 = por %p85, %p86
      %p88 = scmp.ne.s32.totalorder %s74, %s75
      %p89 = scmp.eq.s32.totalorder %s21, 1
      %p90 = por %p88, %p89
      %p92 = scmp.ne.s32.totalorder %s75, %s91
      %p93 = scmp.eq.s32.totalorder %s21, 0
      %p94 = por %p92, %p93
      %s96 = sadd.s32 %s95, 1
      %p99 = scmp.eq.s32.totalorder %s15, 1
      %p100 = scmp.ne.s32.totalorder %s95, %s97
      %p101 = scmp.eq.s32.totalorder %s15, 0
      %p102 = por %p100, %p101
      %p103 = scmp.ne.s32.totalorder %s95, %s97
      %p104 = scmp.eq.s32.totalorder %s20, 1
      %p105 = por %p103, %p104
      %p106 = scmp.ne.s32.totalorder %s97, %s98
      %p107 = scmp.eq.s32.totalorder %s20, 0
      %p108 = por %p106, %p107
      %p109 = scmp.ne.s32.totalorder %s97, %s98
      %p110 = scmp.eq.s32.totalorder %s21, 1
      %p111 = por %p109, %p110
      %p113 = scmp.ne.s32.totalorder %s98, %s112
      %p114 = scmp.eq.s32.totalorder %s21, 0
      %p115 = por %p113, %p114
      %s117 = sadd.s32 %s116, 1
      %p120 = scmp.eq.s32.totalorder %s15, 1
      %p121 = scmp.ne.s32.totalorder %s116, %s118
      %p122 = scmp.eq.s32.totalorder %s15, 0
      %p123 = por %p121, %p122
      %p124 = scmp.ne.s32.totalorder %s116, %s118
      %p125 = scmp.eq.s32.totalorder %s20, 1
      %p126 = por %p124, %p125
      %p127 = scmp.ne.s32.totalorder %s118, %s119
      %p128 = scmp.eq.s32.totalorder %s20, 0
      %p129 = por %p127, %p128
      %p130 = scmp.ne.s32.totalorder %s118, %s119
      %p131 = scmp.eq.s32.totalorder %s21, 1
      %p132 = por %p130, %p131
      %p134 = scmp.ne.s32.totalorder %s119, %s133
      %p135 = scmp.eq.s32.totalorder %s21, 0
      %p136 = por %p134, %p135
      %s138 = sadd.s32 %s137, 1
      %p141 = scmp.eq.s32.totalorder %s15, 1
      %p142 = scmp.ne.s32.totalorder %s137, %s139
      %p143 = scmp.eq.s32.totalorder %s15, 0
      %p144 = por %p142, %p143
      %p145 = scmp.ne.s32.totalorder %s137, %s139
      %p146 = scmp.eq.s32.totalorder %s20, 1
      %p147 = por %p145, %p146
      %p148 = scmp.ne.s32.totalorder %s139, %s140
      %p149 = scmp.eq.s32.totalorder %s20, 0
      %p150 = por %p148, %p149
      %p151 = scmp.ne.s32.totalorder %s139, %s140
      %p152 = scmp.eq.s32.totalorder %s21, 1
      %p153 = por %p151, %p152
      %p155 = scmp.ne.s32.totalorder %s140, %s154
      %p156 = scmp.eq.s32.totalorder %s21, 0
      %p157 = por %p155, %p156
      %s158 = ssub.s32 %s22, %s34
      %p159 = scmp.eq.s32.totalorder %s158, 0
      %s161 = sadd.s32 %s160, 1
      %s162 = scalar_select %p159, %s160, %s161
      %p165 = pneg %p159
      %p166 = scmp.eq.s32.totalorder %s15, 1
      %p167 = por %p165, %p166
      %p168 = scmp.ne.s32.totalorder %s160, %s163
      %p169 = scmp.eq.s32.totalorder %s15, 0
      %p170 = por %p168, %p169
      %p171 = scmp.ne.s32.totalorder %s160, %s163
      %p172 = scmp.eq.s32.totalorder %s20, 1
      %p173 = por %p171, %p172
      %p174 = scmp.ne.s32.totalorder %s163, %s164
      %p175 = scmp.eq.s32.totalorder %s20, 0
      %p176 = por %p174, %p175
      %p177 = scmp.ne.s32.totalorder %s163, %s164
      %p178 = scmp.eq.s32.totalorder %s21, 1
      %p179 = por %p177, %p178
      %p181 = scmp.ne.s32.totalorder %s164, %s180
      %p182 = scmp.eq.s32.totalorder %s21, 0
      %p183 = por %p181, %p182
      %p184 = scmp.le.s32.totalorder 1, %s15
      %p185 = scmp.lt.s32.totalorder %s15, 3
      %p186 = pnand %p184, %p185
      %p187 = pneg %p186
      // Predicated region
      $region9: #{tpu_custom_call.1} parent=5 // pred_check
        _
      $region10: #{tpu_custom_call.1} parent=5 // pred_check_branch
        %189 = sbr.rel (%p186) target = $region12
      $region11: #{tpu_custom_call.1} parent=5 // pred_region
        %s190 = ssub.s32 %s15, 1
        // Predicated region
        $region13: #{tpu_custom_call.1} parent=11 // pred_check
          %p191 = pneg %p108
        $region14: #{tpu_custom_call.1} parent=11 // pred_check_branch
          %193 = sbr.rel (%p191) target = $region16
        $region15: #{tpu_custom_call.1} parent=11 // pred_region
          _
        $region16: #{tpu_custom_call.1} parent=11 // pred_fallthru
          _
        // Predicated region
        $region17: #{tpu_custom_call.1} parent=11 // pred_check
          %p194 = pneg %p129
        $region18: #{tpu_custom_call.1} parent=11 // pred_check_branch
          %196 = sbr.rel (%p194) target = $region20
        $region19: #{tpu_custom_call.1} parent=11 // pred_region
          _
        $region20: #{tpu_custom_call.1} parent=11 // pred_fallthru
          _
        // Predicated region
        $region21: #{tpu_custom_call.1} parent=11 // pred_check
          %p197 = pneg %p150
        $region22: #{tpu_custom_call.1} parent=11 // pred_check_branch
          %199 = sbr.rel (%p197) target = $region24
        $region23: #{tpu_custom_call.1} parent=11 // pred_region
          _
        $region24: #{tpu_custom_call.1} parent=11 // pred_fallthru
          _
      $region12: #{tpu_custom_call.1} parent=5 // pred_fallthru
        _
      %p200 = scmp.lt.s32.totalorder %s15, 2
      // Predicated region
      $region25: #{tpu_custom_call.1} parent=5 // pred_check
        %p201 = pneg %p200
      $region26: #{tpu_custom_call.1} parent=5 // pred_check_branch
        %203 = sbr.rel (%p201) target = $region28
      $region27: #{tpu_custom_call.1} parent=5 // pred_region
        // Predicated region
        $region29: #{tpu_custom_call.1} parent=27 // pred_check
          %p204 = pneg %p51
        $region30: #{tpu_custom_call.1} parent=27 // pred_check_branch
          %206 = sbr.rel (%p204) target = $region32
        $region31: #{tpu_custom_call.1} parent=27 // pred_region
          %s207 = smul.u32 %s22, 2
          %s208 = sadd.s32 %s207, %s23
          %p209 = scmp.lt.s32.totalorder %s208, 1
          %s210 = scalar_select %p209, %s208, 1
          %s211 = scalar_lea.vmem %s0, %s210
          %s212 = smul.u32 %s22, 2
          %s213 = sadd.s32 %s212, %s23
        $region32: #{tpu_custom_call.1} parent=27 // pred_fallthru
          _
        // Predicated region
        $region33: #{tpu_custom_call.1} parent=27 // pred_check
          %p214 = pneg %p81
        $region34: #{tpu_custom_call.1} parent=27 // pred_check_branch
          %216 = sbr.rel (%p214) target = $region36
        $region35: #{tpu_custom_call.1} parent=27 // pred_region
          %s217 = sand.u32 %s71, 1
          %s218 = scalar_lea.sflag [#allocation4], %s217
          %s219 = sand.u32 %s71, 1
          %s220 = smul.addr %s219, 128
          %s221 = scalar_lea.vmem [#allocation3], %s220
          %s222 = smul.u32 %s22, 2
          %s223 = sadd.s32 %s222, %s23
          %s224 = smul.u32 16, %s223
          %s226 = ssub.s32 2048, 2048
          %227 = vsyncadd %s218, %s226
          %s228 = smul.addr %s224, 128
          %s229 = scalar_lea.hbm %s1, %s228
          %s230 = sshll.u32 %s221, 4
          %s231 = int_to_ptr.vmem [resolvable:$true] %s230
          %236 = dma.hbm_to_vmem [thread:$0]  %s229, 2048, %s231, %s218, 128, 128, 8
        $region36: #{tpu_custom_call.1} parent=27 // pred_fallthru
          _
      $region28: #{tpu_custom_call.1} parent=5 // pred_fallthru
        _
      %p237 = scmp.le.s32.totalorder 1, %s15
      %p238 = scmp.lt.s32.totalorder %s15, 3
      %p239 = pnand %p237, %p238
      %p240 = pneg %p239
      // Predicated region
      $region37: #{tpu_custom_call.1} parent=5 // pred_check
        _
      $region38: #{tpu_custom_call.1} parent=5 // pred_check_branch
        %242 = sbr.rel (%p239) target = $region40
      $region39: #{tpu_custom_call.1} parent=5 // pred_region
        %s243 = ssub.s32 %s15, 1
        %s244 = sand.u32 %s74, 1
        %s245 = scalar_lea.sflag [#allocation4], %s244
        %s246 = sand.u32 %s74, 1
        %s247 = smul.addr %s246, 128
        %s248 = scalar_lea.vmem [#allocation3], %s247
        // Predicated region
        $region41: #{tpu_custom_call.1} parent=39 // pred_check
          %p249 = pneg %p87
        $region42: #{tpu_custom_call.1} parent=39 // pred_check_branch
          %251 = sbr.rel (%p249) target = $region44
        $region43: #{tpu_custom_call.1} parent=39 // pred_region
          %252 = dma.done %s245, 2048
        $region44: #{tpu_custom_call.1} parent=39 // pred_fallthru
          _
        %s253 = smul.u32 %s24, 2
        %s254 = sadd.s32 %s253, %s25
        %p255 = scmp.lt.s32.totalorder %s254, 1
        %s256 = scalar_select %p255, %s254, 1
        %s257 = scalar_lea.vmem %s0, %s256
        %p258 = pneg %p57
        %p259 = pneg %p54
        %s260 = sand.u32 %s74, 1
        %s261 = scalar_lea.sflag [#allocation4], %s260
        %s262 = sand.u32 %s74, 1
        %s263 = smul.addr %s262, 128
        %s264 = scalar_lea.vmem [#allocation3], %s263
        %p265 = pneg %p87
        %p266 = pneg %p84
        %p267 = pneg %p108
        %p268 = pneg %p105
        %p269 = pneg %p129
        %p270 = pneg %p126
        %p271 = pneg %p150
        %p272 = pneg %p147
        %p273 = pneg %p176
        %p274 = pneg %p173
        %s275 = smul.u32 %s24, 2
        %s276 = sadd.s32 %s275, %s25
        %p277 = scmp.lt.s32.totalorder %s276, 1
        %s278 = scalar_select %p277, %s276, 1
        %s279 = scalar_lea.vmem %s0, %s278
        %s280 = smul.u32 %s24, 2
        %s281 = sadd.s32 %s280, %s25
        %s282 = smul.u32 %s24, 2
        %s283 = sadd.s32 %s282, %s25
        %s284 = smul.u32 16, %s283
        %p285 = scmp.eq.s32.totalorder %s25, 0
        // Predicated region
        $region45: #{tpu_custom_call.1} parent=39 // pred_check
          %p286 = pneg %p285
        $region46: #{tpu_custom_call.1} parent=39 // pred_check_branch
          %288 = sbr.rel (%p286) target = $region48
        $region47: #{tpu_custom_call.1} parent=39 // pred_region
          %289 = vst [vmem:[#allocation2] sm:$0xf] 0.0
        $region48: #{tpu_custom_call.1} parent=39 // pred_fallthru
          _
        %v290 = vld [vmem:[%s248] sm:$0xff]
        %v291 = vld [vmem:[%s248 + $0x8] sm:$0xff]
        %v292 = vld [vmem:[%s248 + $0x10] sm:$0xff]
        %v293 = vld [vmem:[%s248 + $0x18] sm:$0xff]
        %v294 = vld [vmem:[%s248 + $0x20] sm:$0xff]
        %v295 = vld [vmem:[%s248 + $0x28] sm:$0xff]
        %v296 = vld [vmem:[%s248 + $0x30] sm:$0xff]
        %v297 = vld [vmem:[%s248 + $0x38] sm:$0xff]
        %v298 = vld [vmem:[%s248 + $0x40] sm:$0xff]
        %v299 = vld [vmem:[%s248 + $0x48] sm:$0xff]
        %v300 = vld [vmem:[%s248 + $0x50] sm:$0xff]
        %v301 = vld [vmem:[%s248 + $0x58] sm:$0xff]
        %v302 = vld [vmem:[%s248 + $0x60] sm:$0xff]
        %v303 = vld [vmem:[%s248 + $0x68] sm:$0xff]
        %v304 = vld [vmem:[%s248 + $0x70] sm:$0xff]
        %v305 = vld [vmem:[%s248 + $0x78] sm:$0xff]
        %v306 = vld [vmem:[%s2] sm:$0xff]
        %v307 = vld [vmem:[%s2 + $0x8] sm:$0xff]
        %v308 = vld [vmem:[%s2 + $0x10] sm:$0xff]
        %v309 = vld [vmem:[%s2 + $0x18] sm:$0xff]
        %v310 = vld [vmem:[%s2 + $0x20] sm:$0xff]
        %v311 = vld [vmem:[%s2 + $0x28] sm:$0xff]
        %v312 = vld [vmem:[%s2 + $0x30] sm:$0xff]
        %v313 = vld [vmem:[%s2 + $0x38] sm:$0xff]
        %v314 = vld [vmem:[%s2 + $0x40] sm:$0xff]
        %v315 = vld [vmem:[%s2 + $0x48] sm:$0xff]
        %v316 = vld [vmem:[%s2 + $0x50] sm:$0xff]
        %v317 = vld [vmem:[%s2 + $0x58] sm:$0xff]
        %v318 = vld [vmem:[%s2 + $0x60] sm:$0xff]
        %v319 = vld [vmem:[%s2 + $0x68] sm:$0xff]
        %v320 = vld [vmem:[%s2 + $0x70] sm:$0xff]
        %v321 = vld [vmem:[%s2 + $0x78] sm:$0xff]
        %v322 = vld [vmem:[%s3] sm:$0x1]
        %v324 = vlaneseq
        %v325 = vshrl.u32 %v324, 7
        %v326 = vsub.s32 0, %v325
        %v327 = vrot.slane %v322, %v326
        %329 = vmatprep.subr.mxu0 0.0
        %330 = vmatpush1.msra.mxu0 %v321
        %331 = vmatprep.subr.mxu0 0.0
        %332 = vmatpush1.msra.mxu0 %v320
        %333 = vmatprep.subr.mxu0 0.0
        %334 = vmatpush1.msra.mxu0 %v319
        %335 = vmatprep.subr.mxu0 0.0
        %336 = vmatpush1.msra.mxu0 %v318
        %337 = vmatprep.subr.mxu0 0.0
        %338 = vmatpush1.msra.mxu0 %v317
        %339 = vmatprep.subr.mxu0 0.0
        %340 = vmatpush1.msra.mxu0 %v316
        %341 = vmatprep.subr.mxu0 0.0
        %342 = vmatpush1.msra.mxu0 %v315
        %343 = vmatprep.subr.mxu0 0.0
        %344 = vmatpush1.msra.mxu0 %v314
        %345 = vmatprep.subr.mxu0 0.0
        %346 = vmatpush1.msra.mxu0 %v313
        %347 = vmatprep.subr.mxu0 0.0
        %348 = vmatpush1.msra.mxu0 %v312
        %349 = vmatprep.subr.mxu0 0.0
        %350 = vmatpush1.msra.mxu0 %v311
        %351 = vmatprep.subr.mxu0 0.0
        %352 = vmatpush1.msra.mxu0 %v310
        %353 = vmatprep.subr.mxu0 0.0
        %354 = vmatpush1.msra.mxu0 %v309
        %355 = vmatprep.subr.mxu0 0.0
        %356 = vmatpush1.msra.mxu0 %v308
        %357 = vmatprep.subr.mxu0 0.0
        %358 = vmatpush1.msra.mxu0 %v307
        %359 = vmatprep.subr.mxu0 0.0
        %360 = vmatpush1.msra.mxu0 %v306
        %361 = vmatprep.subr.mxu0 0.0
        %362 = vmatpush2.msra.mxu0 0.0
        %363 = vmatprep.subr.mxu0 0.0
        %364 = vmatpush2.msra.mxu0 0.0
        %365 = vmatprep.subr.mxu0 0.0
        %366 = vmatpush2.msra.mxu0 0.0
        %367 = vmatprep.subr.mxu0 0.0
        %368 = vmatpush2.msra.mxu0 0.0
        %369 = vmatprep.subr.mxu0 0.0
        %370 = vmatpush2.msra.mxu0 0.0
        %371 = vmatprep.subr.mxu0 0.0
        %372 = vmatpush2.msra.mxu0 0.0
        %373 = vmatprep.subr.mxu0 0.0
        %374 = vmatpush2.msra.mxu0 0.0
        %375 = vmatprep.subr.mxu0 0.0
        %376 = vmatpush2.msra.mxu0 0.0
        %377 = vmatprep.subr.mxu0 0.0
        %378 = vmatpush2.msra.mxu0 0.0
        %379 = vmatprep.subr.mxu0 0.0
        %380 = vmatpush2.msra.mxu0 0.0
        %381 = vmatprep.subr.mxu0 0.0
        %382 = vmatpush2.msra.mxu0 0.0
        %383 = vmatprep.subr.mxu0 0.0
        %384 = vmatpush2.msra.mxu0 0.0
        %385 = vmatprep.subr.mxu0 0.0
        %386 = vmatpush2.msra.mxu0 0.0
        %387 = vmatprep.subr.mxu0 0.0
        %388 = vmatpush2.msra.mxu0 0.0
        %389 = vmatprep.subr.mxu0 0.0
        %390 = vmatpush2.msra.mxu0 0.0
        %391 = vmatprep.subr.mxu0 0.0
        %392 = vmatpush2.msra.mxu0 0.0
        %393 = vmatprep.mubr.f32.mxu0 0.0
        %394 = vmatmul.mubr.f32.gmra.mxu0 %v290
        %v395 = vpop.f32.mrf.mxu0
        %v396 = vadd.f32 %v327, %v395
        %v397 = vpop.f32.mrf.mxu0
        %398 = vmatprep.mubr.f32.mxu0 0.0
        %399 = vmatmul.mubr.f32.gmra.mxu0 %v291
        %v400 = vpop.f32.mrf.mxu0
        %v401 = vadd.f32 %v327, %v400
        %v402 = vpop.f32.mrf.mxu0
        %403 = vmatprep.mubr.f32.mxu0 0.0
        %404 = vmatmul.mubr.f32.gmra.mxu0 %v292
        %v405 = vpop.f32.mrf.mxu0
        %v406 = vadd.f32 %v327, %v405
        %v407 = vpop.f32.mrf.mxu0
        %408 = vmatprep.mubr.f32.mxu0 0.0
        %409 = vmatmul.mubr.f32.gmra.mxu0 %v293
        %v410 = vpop.f32.mrf.mxu0
        %v411 = vadd.f32 %v327, %v410
        %v412 = vpop.f32.mrf.mxu0
        %413 = vmatprep.mubr.f32.mxu0 0.0
        %414 = vmatmul.mubr.f32.gmra.mxu0 %v294
        %v415 = vpop.f32.mrf.mxu0
        %v416 = vadd.f32 %v327, %v415
        %v417 = vpop.f32.mrf.mxu0
        %418 = vmatprep.mubr.f32.mxu0 0.0
        %419 = vmatmul.mubr.f32.gmra.mxu0 %v295
        %v420 = vpop.f32.mrf.mxu0
        %v421 = vadd.f32 %v327, %v420
        %v422 = vpop.f32.mrf.mxu0
        %423 = vmatprep.mubr.f32.mxu0 0.0
        %424 = vmatmul.mubr.f32.gmra.mxu0 %v296
        %v425 = vpop.f32.mrf.mxu0
        %v426 = vadd.f32 %v327, %v425
        %v427 = vpop.f32.mrf.mxu0
        %428 = vmatprep.mubr.f32.mxu0 0.0
        %429 = vmatmul.mubr.f32.gmra.mxu0 %v297
        %v430 = vpop.f32.mrf.mxu0
        %v431 = vadd.f32 %v327, %v430
        %v432 = vpop.f32.mrf.mxu0
        %433 = vmatprep.mubr.f32.mxu0 0.0
        %434 = vmatmul.mubr.f32.gmra.mxu0 %v298
        %v435 = vpop.f32.mrf.mxu0
        %v436 = vadd.f32 %v327, %v435
        %v437 = vpop.f32.mrf.mxu0
        %438 = vmatprep.mubr.f32.mxu0 0.0
        %439 = vmatmul.mubr.f32.gmra.mxu0 %v299
        %v440 = vpop.f32.mrf.mxu0
        %v441 = vadd.f32 %v327, %v440
        %v442 = vpop.f32.mrf.mxu0
        %443 = vmatprep.mubr.f32.mxu0 0.0
        %444 = vmatmul.mubr.f32.gmra.mxu0 %v300
        %v445 = vpop.f32.mrf.mxu0
        %v446 = vadd.f32 %v327, %v445
        %v447 = vpop.f32.mrf.mxu0
        %448 = vmatprep.mubr.f32.mxu0 0.0
        %449 = vmatmul.mubr.f32.gmra.mxu0 %v301
        %v450 = vpop.f32.mrf.mxu0
        %v451 = vadd.f32 %v327, %v450
        %v452 = vpop.f32.mrf.mxu0
        %453 = vmatprep.mubr.f32.mxu0 0.0
        %454 = vmatmul.mubr.f32.gmra.mxu0 %v302
        %v455 = vpop.f32.mrf.mxu0
        %v456 = vadd.f32 %v327, %v455
        %v457 = vpop.f32.mrf.mxu0
        %458 = vmatprep.mubr.f32.mxu0 0.0
        %459 = vmatmul.mubr.f32.gmra.mxu0 %v303
        %v460 = vpop.f32.mrf.mxu0
        %v461 = vadd.f32 %v327, %v460
        %v462 = vpop.f32.mrf.mxu0
        %463 = vmatprep.mubr.f32.mxu0 0.0
        %464 = vmatmul.mubr.f32.gmra.mxu0 %v304
        %v465 = vpop.f32.mrf.mxu0
        %v466 = vadd.f32 %v327, %v465
        %v467 = vpop.f32.mrf.mxu0
        %468 = vmatprep.mubr.f32.mxu0 0.0
        %469 = vmatmul.mubr.f32.gmra.mxu0 %v305
        %v470 = vpop.f32.mrf.mxu0
        %v471 = vadd.f32 %v327, %v470
        %v472 = vpop.f32.mrf.mxu0
        %473 = vdwg.mxu0
        %v474 = vxor.u32 %v396, 2147483648
        %v475 = vxor.u32 %v401, 2147483648
        %v476 = vxor.u32 %v406, 2147483648
        %v477 = vxor.u32 %v411, 2147483648
        %v478 = vxor.u32 %v416, 2147483648
        %v479 = vxor.u32 %v421, 2147483648
        %v480 = vxor.u32 %v426, 2147483648
        %v481 = vxor.u32 %v431, 2147483648
        %v482 = vxor.u32 %v436, 2147483648
        %v483 = vxor.u32 %v441, 2147483648
        %v484 = vxor.u32 %v446, 2147483648
        %v485 = vxor.u32 %v451, 2147483648
        %v486 = vxor.u32 %v456, 2147483648
        %v487 = vxor.u32 %v461, 2147483648
        %v488 = vxor.u32 %v466, 2147483648
        %v489 = vxor.u32 %v471, 2147483648
        %v490 = vmul.f32 %v474, 1.442695
        %v491 = vpow.pop %v490
        %v492 = vmul.f32 %v475, 1.442695
        %v493 = vpow.pop %v492
        %v494 = vmul.f32 %v476, 1.442695
        %v495 = vpow.pop %v494
        %v496 = vmul.f32 %v477, 1.442695
        %v497 = vpow.pop %v496
        %v498 = vmul.f32 %v478, 1.442695
        %v499 = vpow.pop %v498
        %v500 = vmul.f32 %v479, 1.442695
        %v501 = vpow.pop %v500
        %v502 = vmul.f32 %v480, 1.442695
        %v503 = vpow.pop %v502
        %v504 = vmul.f32 %v481, 1.442695
        %v505 = vpow.pop %v504
        %v506 = vmul.f32 %v482, 1.442695
        %v507 = vpow.pop %v506
        %v508 = vmul.f32 %v483, 1.442695
        %v509 = vpow.pop %v508
        %v510 = vmul.f32 %v484, 1.442695
        %v511 = vpow.pop %v510
        %v512 = vmul.f32 %v485, 1.442695
        %v513 = vpow.pop %v512
        %v514 = vmul.f32 %v486, 1.442695
        %v515 = vpow.pop %v514
        %v516 = vmul.f32 %v487, 1.442695
        %v517 = vpow.pop %v516
        %v518 = vmul.f32 %v488, 1.442695
        %v519 = vpow.pop %v518
        %v520 = vmul.f32 %v489, 1.442695
        %v521 = vpow.pop %v520
        %v522 = vadd.f32 %v491, 1.0
        %v523 = vadd.f32 %v493, 1.0
        %v524 = vadd.f32 %v495, 1.0
        %v525 = vadd.f32 %v497, 1.0
        %v526 = vadd.f32 %v499, 1.0
        %v527 = vadd.f32 %v501, 1.0
        %v528 = vadd.f32 %v503, 1.0
        %v529 = vadd.f32 %v505, 1.0
        %v530 = vadd.f32 %v507, 1.0
        %v531 = vadd.f32 %v509, 1.0
        %v532 = vadd.f32 %v511, 1.0
        %v533 = vadd.f32 %v513, 1.0
        %v534 = vadd.f32 %v515, 1.0
        %v535 = vadd.f32 %v517, 1.0
        %v536 = vadd.f32 %v519, 1.0
        %v537 = vadd.f32 %v521, 1.0
        %v538 = vrcp.pop %v522
        %v539 = vmul.f32 1.0, %v538
        %v540 = vrcp.pop %v523
        %v541 = vmul.f32 1.0, %v540
        %v542 = vrcp.pop %v524
        %v543 = vmul.f32 1.0, %v542
        %v544 = vrcp.pop %v525
        %v545 = vmul.f32 1.0, %v544
        %v546 = vrcp.pop %v526
        %v547 = vmul.f32 1.0, %v546
        %v548 = vrcp.pop %v527
        %v549 = vmul.f32 1.0, %v548
        %v550 = vrcp.pop %v528
        %v551 = vmul.f32 1.0, %v550
        %v552 = vrcp.pop %v529
        %v553 = vmul.f32 1.0, %v552
        %v554 = vrcp.pop %v530
        %v555 = vmul.f32 1.0, %v554
        %v556 = vrcp.pop %v531
        %v557 = vmul.f32 1.0, %v556
        %v558 = vrcp.pop %v532
        %v559 = vmul.f32 1.0, %v558
        %v560 = vrcp.pop %v533
        %v561 = vmul.f32 1.0, %v560
        %v562 = vrcp.pop %v534
        %v563 = vmul.f32 1.0, %v562
        %v564 = vrcp.pop %v535
        %v565 = vmul.f32 1.0, %v564
        %v566 = vrcp.pop %v536
        %v567 = vmul.f32 1.0, %v566
        %v568 = vrcp.pop %v537
        %v569 = vmul.f32 1.0, %v568
        %v570 = vmul.f32 %v396, %v539
        %v571 = vmul.f32 %v401, %v541
        %v572 = vmul.f32 %v406, %v543
        %v573 = vmul.f32 %v411, %v545
        %v574 = vmul.f32 %v416, %v547
        %v575 = vmul.f32 %v421, %v549
        %v576 = vmul.f32 %v426, %v551
        %v577 = vmul.f32 %v431, %v553
        %v578 = vmul.f32 %v436, %v555
        %v579 = vmul.f32 %v441, %v557
        %v580 = vmul.f32 %v446, %v559
        %v581 = vmul.f32 %v451, %v561
        %v582 = vmul.f32 %v456, %v563
        %v583 = vmul.f32 %v461, %v565
        %v584 = vmul.f32 %v466, %v567
        %v585 = vmul.f32 %v471, %v569
        %v586 = vlaneseq
        %v587 = vshrl.u32 %v586, 7
        %v588 = vld [vmem:[%s279] sm:$0x1]
        %v589 = vlaneseq
        %v590 = vshrl.u32 %v589, 7
        %v591 = vsub.s32 0, %v590
        %v592 = vrot.slane %v588, %v591
        %vm593 = vcmp.eq.s32.totalorder %v587, %v592
        %v594 = vsel %vm593, 1, 0
        %v595 = vcvt.s32.f32 %v594
        %v596 = vld [vmem:[#allocation2] sm:$0xf]
        %597 = vmatprep.subr.mxu0 0.0
        %598 = vmatpush1.msra.mxu0 %v585
        %599 = vmatprep.subr.mxu0 0.0
        %600 = vmatpush1.msra.mxu0 %v584
        %601 = vmatprep.subr.mxu0 0.0
        %602 = vmatpush1.msra.mxu0 %v583
        %603 = vmatprep.subr.mxu0 0.0
        %604 = vmatpush1.msra.mxu0 %v582
        %605 = vmatprep.subr.mxu0 0.0
        %606 = vmatpush1.msra.mxu0 %v581
        %607 = vmatprep.subr.mxu0 0.0
        %608 = vmatpush1.msra.mxu0 %v580
        %609 = vmatprep.subr.mxu0 0.0
        %610 = vmatpush1.msra.mxu0 %v579
        %611 = vmatprep.subr.mxu0 0.0
        %612 = vmatpush1.msra.mxu0 %v578
        %613 = vmatprep.subr.mxu0 0.0
        %614 = vmatpush1.msra.mxu0 %v577
        %615 = vmatprep.subr.mxu0 0.0
        %616 = vmatpush1.msra.mxu0 %v576
        %617 = vmatprep.subr.mxu0 0.0
        %618 = vmatpush1.msra.mxu0 %v575
        %619 = vmatprep.subr.mxu0 0.0
        %620 = vmatpush1.msra.mxu0 %v574
        %621 = vmatprep.subr.mxu0 0.0
        %622 = vmatpush1.msra.mxu0 %v573
        %623 = vmatprep.subr.mxu0 0.0
        %624 = vmatpush1.msra.mxu0 %v572
        %625 = vmatprep.subr.mxu0 0.0
        %626 = vmatpush1.msra.mxu0 %v571
        %627 = vmatprep.subr.mxu0 0.0
        %628 = vmatpush1.msra.mxu0 %v570
        %629 = vmatprep.subr.mxu0 0.0
        %630 = vmatpush2.msra.mxu0 0.0
        %631 = vmatprep.subr.mxu0 0.0
        %632 = vmatpush2.msra.mxu0 0.0
        %633 = vmatprep.subr.mxu0 0.0
        %634 = vmatpush2.msra.mxu0 0.0
        %635 = vmatprep.subr.mxu0 0.0
        %636 = vmatpush2.msra.mxu0 0.0
        %637 = vmatprep.subr.mxu0 0.0
        %638 = vmatpush2.msra.mxu0 0.0
        %639 = vmatprep.subr.mxu0 0.0
        %640 = vmatpush2.msra.mxu0 0.0
        %641 = vmatprep.subr.mxu0 0.0
        %642 = vmatpush2.msra.mxu0 0.0
        %643 = vmatprep.subr.mxu0 0.0
        %644 = vmatpush2.msra.mxu0 0.0
        %645 = vmatprep.subr.mxu0 0.0
        %646 = vmatpush2.msra.mxu0 0.0
        %647 = vmatprep.subr.mxu0 0.0
        %648 = vmatpush2.msra.mxu0 0.0
        %649 = vmatprep.subr.mxu0 0.0
        %650 = vmatpush2.msra.mxu0 0.0
        %651 = vmatprep.subr.mxu0 0.0
        %652 = vmatpush2.msra.mxu0 0.0
        %653 = vmatprep.subr.mxu0 0.0
        %654 = vmatpush2.msra.mxu0 0.0
        %655 = vmatprep.subr.mxu0 0.0
        %656 = vmatpush2.msra.mxu0 0.0
        %657 = vmatprep.subr.mxu0 0.0
        %658 = vmatpush2.msra.mxu0 0.0
        %659 = vmatprep.subr.mxu0 0.0
        %660 = vmatpush2.msra.mxu0 0.0
        %661 = vmatprep.mubr.f32.mxu0 0.0
        %662 = vmatmul.mubr.f32.gmra.mxu0 %v595
        %v663 = vpop.f32.mrf.mxu0
        %v664 = vadd.f32 0.0, %v663
        %v665 = vpop.f32.mrf.mxu0
        %666 = vdwg.mxu0
        %v667 = vadd.f32 %v596, %v664
        %668 = vst [vmem:[#allocation2] sm:$0xf] %v667
        %p669 = scmp.eq.s32.totalorder %s25, 1
        // Predicated region
        $region49: #{tpu_custom_call.1} parent=39 // pred_check
          %p670 = pneg %p669
        $region50: #{tpu_custom_call.1} parent=39 // pred_check_branch
          %672 = sbr.rel (%p670) target = $region52
        $region51: #{tpu_custom_call.1} parent=39 // pred_region
          %v673 = vld [vmem:[#allocation2] sm:$0xf]
          %v674 = vld [vmem:[%s4] sm:$0xff]
          %v675 = vld [vmem:[%s4 + $0x8] sm:$0xff]
          %v676 = vld [vmem:[%s4 + $0x10] sm:$0xff]
          %v677 = vld [vmem:[%s4 + $0x18] sm:$0xff]
          %v678 = vld [vmem:[%s4 + $0x20] sm:$0xff]
          %v679 = vld [vmem:[%s4 + $0x28] sm:$0xff]
          %v680 = vld [vmem:[%s4 + $0x30] sm:$0xff]
          %v681 = vld [vmem:[%s4 + $0x38] sm:$0xff]
          %v682 = vld [vmem:[%s4 + $0x40] sm:$0xff]
          %v683 = vld [vmem:[%s4 + $0x48] sm:$0xff]
          %v684 = vld [vmem:[%s4 + $0x50] sm:$0xff]
          %v685 = vld [vmem:[%s4 + $0x58] sm:$0xff]
          %v686 = vld [vmem:[%s4 + $0x60] sm:$0xff]
          %v687 = vld [vmem:[%s4 + $0x68] sm:$0xff]
          %v688 = vld [vmem:[%s4 + $0x70] sm:$0xff]
          %v689 = vld [vmem:[%s4 + $0x78] sm:$0xff]
          %690 = vmatprep.subr.mxu0 0.0
          %691 = vmatpush1.msra.mxu0 %v689
          %692 = vmatprep.subr.mxu0 0.0
          %693 = vmatpush1.msra.mxu0 %v688
          %694 = vmatprep.subr.mxu0 0.0
          %695 = vmatpush1.msra.mxu0 %v687
          %696 = vmatprep.subr.mxu0 0.0
          %697 = vmatpush1.msra.mxu0 %v686
          %698 = vmatprep.subr.mxu0 0.0
          %699 = vmatpush1.msra.mxu0 %v685
          %700 = vmatprep.subr.mxu0 0.0
          %701 = vmatpush1.msra.mxu0 %v684
          %702 = vmatprep.subr.mxu0 0.0
          %703 = vmatpush1.msra.mxu0 %v683
          %704 = vmatprep.subr.mxu0 0.0
          %705 = vmatpush1.msra.mxu0 %v682
          %706 = vmatprep.subr.mxu0 0.0
          %707 = vmatpush1.msra.mxu0 %v681
          %708 = vmatprep.subr.mxu0 0.0
          %709 = vmatpush1.msra.mxu0 %v680
          %710 = vmatprep.subr.mxu0 0.0
          %711 = vmatpush1.msra.mxu0 %v679
          %712 = vmatprep.subr.mxu0 0.0
          %713 = vmatpush1.msra.mxu0 %v678
          %714 = vmatprep.subr.mxu0 0.0
          %715 = vmatpush1.msra.mxu0 %v677
          %716 = vmatprep.subr.mxu0 0.0
          %717 = vmatpush1.msra.mxu0 %v676
          %718 = vmatprep.subr.mxu0 0.0
          %719 = vmatpush1.msra.mxu0 %v675
          %720 = vmatprep.subr.mxu0 0.0
          %721 = vmatpush1.msra.mxu0 %v674
          %722 = vmatprep.subr.mxu0 0.0
          %723 = vmatpush2.msra.mxu0 0.0
          %724 = vmatprep.subr.mxu0 0.0
          %725 = vmatpush2.msra.mxu0 0.0
          %726 = vmatprep.subr.mxu0 0.0
          %727 = vmatpush2.msra.mxu0 0.0
          %728 = vmatprep.subr.mxu0 0.0
          %729 = vmatpush2.msra.mxu0 0.0
          %730 = vmatprep.subr.mxu0 0.0
          %731 = vmatpush2.msra.mxu0 0.0
          %732 = vmatprep.subr.mxu0 0.0
          %733 = vmatpush2.msra.mxu0 0.0
          %734 = vmatprep.subr.mxu0 0.0
          %735 = vmatpush2.msra.mxu0 0.0
          %736 = vmatprep.subr.mxu0 0.0
          %737 = vmatpush2.msra.mxu0 0.0
          %738 = vmatprep.subr.mxu0 0.0
          %739 = vmatpush2.msra.mxu0 0.0
          %740 = vmatprep.subr.mxu0 0.0
          %741 = vmatpush2.msra.mxu0 0.0
          %742 = vmatprep.subr.mxu0 0.0
          %743 = vmatpush2.msra.mxu0 0.0
          %744 = vmatprep.subr.mxu0 0.0
          %745 = vmatpush2.msra.mxu0 0.0
          %746 = vmatprep.subr.mxu0 0.0
          %747 = vmatpush2.msra.mxu0 0.0
          %748 = vmatprep.subr.mxu0 0.0
          %749 = vmatpush2.msra.mxu0 0.0
          %750 = vmatprep.subr.mxu0 0.0
          %751 = vmatpush2.msra.mxu0 0.0
          %752 = vmatprep.subr.mxu0 0.0
          %753 = vmatpush2.msra.mxu0 0.0
          %754 = vmatprep.mubr.f32.mxu0 0.0
          %755 = vmatmul.mubr.f32.gmra.mxu0 %v673
          %v756 = vpop.f32.mrf.mxu0
          %v757 = vadd.f32 0.0, %v756
          %v758 = vpop.f32.mrf.mxu0
          %759 = vdwg.mxu0
          %vm760 = vcmask 60416
          %761 = vst.msk [vmem:[#allocation6] sm:$0xf] %vm760, %v757
        $region52: #{tpu_custom_call.1} parent=39 // pred_fallthru
          _
        // Predicated region
        $region53: #{tpu_custom_call.1} parent=39 // pred_check
          %p762 = pneg %p173
        $region54: #{tpu_custom_call.1} parent=39 // pred_check_branch
          %764 = sbr.rel (%p762) target = $region56
        $region55: #{tpu_custom_call.1} parent=39 // pred_region
          %s766 = ssub.s32 64, 64
          %767 = vsyncadd [#allocation5], %s766
          %s768 = smul.addr %s24, 64
          %s769 = scalar_lea.hbm %s5, %s768
          %s771 = sshll.u32 [#allocation6], 4
          %s772 = int_to_ptr.vmem [resolvable:$true] %s771
          %774 = dma.vmem_to_hbm [thread:$0]  %s772, 64, %s769, [#allocation5]
        $region56: #{tpu_custom_call.1} parent=39 // pred_fallthru
          _
        // Predicated region
        $region57: #{tpu_custom_call.1} parent=39 // pred_check
          %p775 = pneg %p173
        $region58: #{tpu_custom_call.1} parent=39 // pred_check_branch
          %777 = sbr.rel (%p775) target = $region60
        $region59: #{tpu_custom_call.1} parent=39 // pred_region
          %778 = dma.done [#allocation5], 64
        $region60: #{tpu_custom_call.1} parent=39 // pred_fallthru
          _
      $region40: #{tpu_custom_call.1} parent=5 // pred_fallthru
        _
      %p779 = scmp.le.s32.totalorder 2, %s15
      // Predicated region
      $region61: #{tpu_custom_call.1} parent=5 // pred_check
        %p780 = pneg %p779
      $region62: #{tpu_custom_call.1} parent=5 // pred_check_branch
        %782 = sbr.rel (%p780) target = $region64
      $region63: #{tpu_custom_call.1} parent=5 // pred_region
        %s783 = ssub.s32 %s15, 2
      $region64: #{tpu_custom_call.1} parent=5 // pred_fallthru
        _
    $region6: #{tpu_custom_call.1} parent=1 // loop_footer
      %s19 = sadd.s32 1, %s15
    $region7: #{tpu_custom_call.1} parent=1 // loop_footer_branch
      %14 = sbr.rel target = $region3
    $region8: #{tpu_custom_call.1} parent=1 // loop_exit
      _
    %784 = vsyncpa [#allocation4], 1
    %s785 = scalar_lea.sflag [#allocation4], 1
    %786 = vsyncpa %s785, 1
    %787 = vsyncpa [#allocation5], 1
    %s788 = scalar_lea.sflag [#allocation5], 1
    %789 = vsyncpa %s788, 1

</llo_original>
